<compile_context>
chip_gen: v5e
topology: v5e:2x2
jax: 0.10.0
libtpu: 0.0.40
codegen_flags: <defaults>
</compile_context>

<pallas_src>
import functools

import jax
import jax.numpy as jnp
from jax import lax
from jax.experimental import pallas as pl
from jax.experimental.pallas import tpu as pltpu


def k20_kernel(coeff_ref, u1_ref, v1_ref, u2_ref, v2_ref, out_ref,
               acc_a_ref, acc_b_ref, *, acc_dtype):
    """Grid = (i over N-tiles, j over M-tiles, k over L-tiles); k is the reduction."""
    k = pl.program_id(2)

    @pl.when(k == 0)
    def _():
        acc_a_ref[...] = jnp.zeros_like(acc_a_ref)
        acc_b_ref[...] = jnp.zeros_like(acc_b_ref)

    # Two MXU-native (M,K)x(K,N) matmuls per L-tile.  Operands already hold
    # {-1,0,1} / {0,1} in the MXU dtype (int8 on v5e/v6e, fp8 on v7x, bf16
    # otherwise), so the steady state has no VPU indicator work at all.
    acc_a_ref[...] += jnp.dot(u1_ref[...], u2_ref[...],
                              preferred_element_type=acc_dtype)
    acc_b_ref[...] += jnp.dot(v1_ref[...], v2_ref[...],
                              preferred_element_type=acc_dtype)

    @pl.when(k == pl.num_programs(2) - 1)
    def _():
        a = acc_a_ref[...].astype(jnp.float32)   # S2 - D2 (exact counts)
        b = acc_b_ref[...].astype(jnp.float32)   # S2 + D2 (exact counts)
        c0 = coeff_ref[0]                        # 2 * exp(par0), scalar in SMEM
        c1 = coeff_ref[1]                        # 2 * exp(par1), scalar in SMEM
        # out = 2*exp(par0)*(S2-D2) + 2*exp(par1)*((S2-D2)^2 - (S2+D2))
        out_ref[...] = c0 * a + c1 * (a * a - b)


def _round_up(x, m):
    return ((x + m - 1) // m) * m


def _mxu_dtypes():
    """Pick MXU operand / accumulator dtypes for the local TPU generation."""
    kind = ""
    try:
        kind = jax.devices()[0].device_kind.lower()
    except Exception:
        pass
    if "v7" in kind:
        # v7x MXU has bf16 + fp8, no integer path. {-1,0,1} are exact in e4m3.
        if hasattr(jnp, "float8_e4m3fn"):
            return jnp.float8_e4m3fn, jnp.float32
        return jnp.bfloat16, jnp.float32
    if "v5" in kind or "v6" in kind:
        # v5e/v5p/v6e MXU runs int8 at ~2x the bf16 rate; counts are exact in int32.
        return jnp.int8, jnp.int32
    # Unknown / older generation: bf16 operands are universally supported.
    return jnp.bfloat16, jnp.float32


def _indicators(g, dtype):
    """u = (g==0) - (g==2) in {-1,0,1};  v = (g==0) + (g==2) in {0,1}."""
    g = g.astype(jnp.float32)
    h0 = (g == 0.0).astype(jnp.float32)
    h1 = (g == 2.0).astype(jnp.float32)
    return (h0 - h1).astype(dtype), (h0 + h1).astype(dtype)


def k20_forward(geno1, geno2, raw_par, *, tn=512, tm=512, tl=1024):
    """Pallas implementation of K20.forward (dense kernel matrix only)."""
    N, L = geno1.shape
    M, L2 = geno2.shape
    assert L == L2, "geno1 and geno2 must have the same number of loci"

    op_dtype, acc_dtype = _mxu_dtypes()
    isz = jnp.dtype(op_dtype).itemsize

    # gpytorch LessThan(upper_bound=0.0) constraint: par = 0.0 - softplus(-raw_par).
    par = -jax.nn.softplus(-raw_par.astype(jnp.float32))
    # Pre-scale by 2 so the epilogue is just out = c0*A + c1*(A*A - B).
    coeff = 2.0 * jnp.exp(par)  # (2,)

    # Tile sizes: shrink to the (padded) problem size when small.  Sublane
    # multiple depends on operand packing (32 for 8-bit dtypes, 16 for bf16).
    sub = 32 if isz == 1 else 16
    TN = min(tn, _round_up(N, sub))
    TM = min(tm, _round_up(M, 128))
    TL = min(tl, _round_up(L, 128))

    Np = _round_up(N, TN)
    Mp = _round_up(M, TM)
    Lp = _round_up(L, TL)

    # Hoisted indicator construction (one pass over each genotype matrix).
    u1, v1 = _indicators(geno1, op_dtype)   # (N, L)
    u2, v2 = _indicators(geno2, op_dtype)   # (M, L)

    # Zero-pad (padded rows / loci contribute nothing to either count) and
    # pre-transpose geno2's indicators to (L, M) so both matmuls are MXU-native
    # (M,K)x(K,N) contractions with no in-kernel transpose.
    u1 = jnp.pad(u1, ((0, Np - N), (0, Lp - L)))
    v1 = jnp.pad(v1, ((0, Np - N), (0, Lp - L)))
    u2t = jnp.pad(u2.T, ((0, Lp - L), (0, Mp - M)))
    v2t = jnp.pad(v2.T, ((0, Lp - L), (0, Mp - M)))

    grid = (Np // TN, Mp // TM, Lp // TL)
    # TODO(synk): on v7x (2 TensorCores) a 1x1 parallel grid leaves one core idle;
    # for tiny N/M this is irrelevant, for large problems the grid is already >1.

    cost = pl.CostEstimate(
        flops=int(4 * Np * Mp * Lp),  # 2 matmuls x 2*N*M*L
        transcendentals=0,
        bytes_accessed=int(2 * isz * (Np * Lp * (Mp // TM) + Mp * Lp * (Np // TN))
                           + 4 * Np * Mp),
    )

    out = pl.pallas_call(
        functools.partial(k20_kernel, acc_dtype=acc_dtype),
        out_shape=jax.ShapeDtypeStruct((Np, Mp), jnp.float32),
        grid_spec=pltpu.PrefetchScalarGridSpec(
            num_scalar_prefetch=0,
            grid=grid,
            in_specs=[
                pl.BlockSpec(memory_space=pltpu.MemorySpace.SMEM),   # coeff (2,)
                pl.BlockSpec((TN, TL), lambda i, j, k: (i, k)),      # u1 tile
                pl.BlockSpec((TN, TL), lambda i, j, k: (i, k)),      # v1 tile
                pl.BlockSpec((TL, TM), lambda i, j, k: (k, j)),      # u2^T tile
                pl.BlockSpec((TL, TM), lambda i, j, k: (k, j)),      # v2^T tile
            ],
            out_specs=pl.BlockSpec((TN, TM), lambda i, j, k: (i, j)),
            scratch_shapes=[
                pltpu.VMEM((TN, TM), acc_dtype),   # accumulator for S2 - D2
                pltpu.VMEM((TN, TM), acc_dtype),   # accumulator for S2 + D2
            ],
        ),
        compiler_params=pltpu.CompilerParams(
            dimension_semantics=("parallel", "parallel", "arbitrary"),
            vmem_limit_bytes=48 * 1024 * 1024,
        ),
        cost_estimate=cost,
    )(coeff, u1, v1, u2t, v2t)

    return out[:N, :M]


def k20_reference(geno1, geno2, raw_par):
    """Pure-JAX reference mirroring the PyTorch K20.forward literally."""
    geno1 = geno1.astype(jnp.float32)
    geno2 = geno2.astype(jnp.float32)
    L = geno1.shape[1]
    par = -jax.nn.softplus(-raw_par.astype(jnp.float32))
    ht1 = (geno1 == 1.0).astype(jnp.float32)
    ht2 = (geno2 == 1.0).astype(jnp.float32)
    h0_1 = (geno1 == 0.0).astype(jnp.float32)
    h1_1 = (geno1 == 2.0).astype(jnp.float32)
    h0_2 = (geno2 == 0.0).astype(jnp.float32)
    h1_2 = (geno2 == 2.0).astype(jnp.float32)
    mm = lambda a, b: jnp.matmul(a, b, precision=lax.Precision.HIGHEST)
    clamp = lambda x: jnp.maximum(x, 0.0)
    S1 = clamp(mm(ht1, ht2.T))
    S2 = clamp(mm(h0_1, h0_2.T)) + clamp(mm(h1_1, h1_2.T))
    D2 = clamp(mm(h0_1, h1_2.T)) + clamp(mm(h1_1, h0_2.T))
    D1 = L - S1 - S2 - D2
    k_1_0 = -2.0 * D2 + 2.0 * S2
    k_2_0 = 2.0 * D2 * (D2 - 1.0) - 4.0 * D2 * S2 + 2.0 * (S2 - 1.0) * S2
    del D1
    return jnp.exp(par[0]) * k_1_0 + jnp.exp(par[1]) * k_2_0


if __name__ == "__main__":
    key = jax.random.PRNGKey(0)

    # Deterministic parameter init: raw_par = zeros(2), as in the module's __init__.
    raw_par = jnp.zeros((2,), dtype=jnp.float32)

    # Case 1: tiny shapes (single grid step, heavy padding path).
    k1, k2, k3, k4 = jax.random.split(key, 4)
    N, M, L = 8, 8, 32
    geno1 = jax.random.randint(k1, (N, L), 0, 3).astype(jnp.float32)
    geno2 = jax.random.randint(k2, (M, L), 0, 3).astype(jnp.float32)
    out = jax.block_until_ready(k20_forward(geno1, geno2, raw_par))
    ref = k20_reference(geno1, geno2, raw_par)
    assert out.shape == (N, M)
    assert jnp.allclose(out, ref, atol=1e-3, rtol=1e-5), "mismatch vs reference (small)"

    # Case 2: modest shapes exercising the tiling / padding of all three axes.
    N2, M2, L2 = 300, 260, 700
    geno1b = jax.random.randint(k3, (N2, L2), 0, 3).astype(jnp.float32)
    geno2b = jax.random.randint(k4, (M2, L2), 0, 3).astype(jnp.float32)
    out2 = jax.block_until_ready(k20_forward(geno1b, geno2b, raw_par))
    ref2 = k20_reference(geno1b, geno2b, raw_par)
    assert out2.shape == (N2, M2)
    assert jnp.allclose(out2, ref2, atol=1e-2, rtol=1e-5), "mismatch vs reference (tiled)"

    # TODO(synk): gpytorch lazy-tensor wrapping, diag mode and active_dims handling
    # from Kernel.__call__ are not reproduced; only the dense forward is computed.
    print("KERNEL_OK")
</pallas_src>

<mosaic_0001>
module attributes {stable_mosaic.version = 11 : i64} {
  func.func @k20_kernel(%arg0: i32, %arg1: i32, %arg2: i32, %arg3: memref<2xf32, #tpu.memory_space<smem>>, %arg4: memref<16x128xbf16, #tpu.memory_space<vmem>>, %arg5: memref<16x128xbf16, #tpu.memory_space<vmem>>, %arg6: memref<128x128xbf16, #tpu.memory_space<vmem>>, %arg7: memref<128x128xbf16, #tpu.memory_space<vmem>>, %arg8: memref<16x128xf32, #tpu.memory_space<vmem>>, %arg9: memref<16x128xf32, #tpu.memory_space<vmem>>, %arg10: memref<16x128xf32, #tpu.memory_space<vmem>>) attributes {dimension_semantics = [#tpu.dimension_semantics<parallel>, #tpu.dimension_semantics<parallel>, #tpu.dimension_semantics<arbitrary>], iteration_bounds = array<i64: 1, 1, 1>, scalar_prefetch = 0 : i64, scratch_operands = 2 : i64, tpu.core_type = #tpu.core_type<tc>, window_params = [{transform_indices = @transform_0, window_bounds = array<i64: 2>}, {transform_indices = @transform_1, window_bounds = array<i64: 16, 128>}, {transform_indices = @transform_2, window_bounds = array<i64: 16, 128>}, {transform_indices = @transform_3, window_bounds = array<i64: 128, 128>}, {transform_indices = @transform_4, window_bounds = array<i64: 128, 128>}, {transform_indices = @transform_5, window_bounds = array<i64: 16, 128>}]} {
    %c0_i32 = arith.constant 0 : i32
    %0 = arith.cmpi eq, %arg2, %c0_i32 : i32
    %1 = arith.extui %0 : i1 to i32
    %c0_i32_0 = arith.constant 0 : i32
    %2 = arith.cmpi ne, %1, %c0_i32_0 : i32
    scf.if %2 {
      %cst_19 = arith.constant 0.000000e+00 : f32
      %18 = vector.broadcast %cst_19 : f32 to vector<16x128xf32>
      %c0_20 = arith.constant 0 : index
      %c0_21 = arith.constant 0 : index
      %19 = vector.load %arg9[%c0_20, %c0_21] : memref<16x128xf32, #tpu.memory_space<vmem>>, vector<16x128xf32>
      tpu.vector_store %arg9[%c0_20, %c0_21], %18 {strides = array<i32>} : memref<16x128xf32, #tpu.memory_space<vmem>>, vector<16x128xf32>,
      %cst_22 = arith.constant 0.000000e+00 : f32
      %20 = vector.broadcast %cst_22 : f32 to vector<16x128xf32>
      %c0_23 = arith.constant 0 : index
      %c0_24 = arith.constant 0 : index
      %21 = vector.load %arg10[%c0_23, %c0_24] : memref<16x128xf32, #tpu.memory_space<vmem>>, vector<16x128xf32>
      tpu.vector_store %arg10[%c0_23, %c0_24], %20 {strides = array<i32>} : memref<16x128xf32, #tpu.memory_space<vmem>>, vector<16x128xf32>,
    } else {
    }
    %c0 = arith.constant 0 : index
    %c0_1 = arith.constant 0 : index
    %3 = vector.load %arg9[%c0, %c0_1] : memref<16x128xf32, #tpu.memory_space<vmem>>, vector<16x128xf32>
    %c0_2 = arith.constant 0 : index
    %c0_3 = arith.constant 0 : index
    %4 = vector.load %arg4[%c0_2, %c0_3] : memref<16x128xbf16, #tpu.memory_space<vmem>>, vector<16x128xbf16>
    %c0_4 = arith.constant 0 : index
    %c0_5 = arith.constant 0 : index
    %5 = vector.load %arg6[%c0_4, %c0_5] : memref<128x128xbf16, #tpu.memory_space<vmem>>, vector<128x128xbf16>
    %cst = arith.constant dense<0.000000e+00> : vector<16x128xf32>
    %6 = tpu.matmul %4, %5, %cst {dimension_numbers = #tpu.dot_dimension_numbers<[1], [0], [0], [1], [0, 0, 1, 1], [], []>} : vector<16x128xbf16>, vector<128x128xbf16>, vector<16x128xf32> -> vector<16x128xf32>
    %7 = arith.addf %3, %6 : vector<16x128xf32>
    %c0_6 = arith.constant 0 : index
    %c0_7 = arith.constant 0 : index
    %8 = vector.load %arg9[%c0_6, %c0_7] : memref<16x128xf32, #tpu.memory_space<vmem>>, vector<16x128xf32>
    tpu.vector_store %arg9[%c0_6, %c0_7], %7 {strides = array<i32>} : memref<16x128xf32, #tpu.memory_space<vmem>>, vector<16x128xf32>,
    %c0_8 = arith.constant 0 : index
    %c0_9 = arith.constant 0 : index
    %9 = vector.load %arg10[%c0_8, %c0_9] : memref<16x128xf32, #tpu.memory_space<vmem>>, vector<16x128xf32>
    %c0_10 = arith.constant 0 : index
    %c0_11 = arith.constant 0 : index
    %10 = vector.load %arg5[%c0_10, %c0_11] : memref<16x128xbf16, #tpu.memory_space<vmem>>, vector<16x128xbf16>
    %c0_12 = arith.constant 0 : index
    %c0_13 = arith.constant 0 : index
    %11 = vector.load %arg7[%c0_12, %c0_13] : memref<128x128xbf16, #tpu.memory_space<vmem>>, vector<128x128xbf16>
    %cst_14 = arith.constant dense<0.000000e+00> : vector<16x128xf32>
    %12 = tpu.matmul %10, %11, %cst_14 {dimension_numbers = #tpu.dot_dimension_numbers<[1], [0], [0], [1], [0, 0, 1, 1], [], []>} : vector<16x128xbf16>, vector<128x128xbf16>, vector<16x128xf32> -> vector<16x128xf32>
    %13 = arith.addf %9, %12 : vector<16x128xf32>
    %c0_15 = arith.constant 0 : index
    %c0_16 = arith.constant 0 : index
    %14 = vector.load %arg10[%c0_15, %c0_16] : memref<16x128xf32, #tpu.memory_space<vmem>>, vector<16x128xf32>
    tpu.vector_store %arg10[%c0_15, %c0_16], %13 {strides = array<i32>} : memref<16x128xf32, #tpu.memory_space<vmem>>, vector<16x128xf32>,
    %c0_i32_17 = arith.constant 0 : i32
    %15 = arith.cmpi eq, %arg2, %c0_i32_17 : i32
    %16 = arith.extui %15 : i1 to i32
    %c0_i32_18 = arith.constant 0 : i32
    %17 = arith.cmpi ne, %16, %c0_i32_18 : i32
    scf.if %17 {
      %c0_19 = arith.constant 0 : index
      %c0_20 = arith.constant 0 : index
      %18 = vector.load %arg9[%c0_19, %c0_20] : memref<16x128xf32, #tpu.memory_space<vmem>>, vector<16x128xf32>
      %c0_21 = arith.constant 0 : index
      %c0_22 = arith.constant 0 : index
      %19 = vector.load %arg10[%c0_21, %c0_22] : memref<16x128xf32, #tpu.memory_space<vmem>>, vector<16x128xf32>
      %c0_23 = arith.constant 0 : index
      %20 = memref.load %arg3[%c0_23] : memref<2xf32, #tpu.memory_space<smem>>
      %c1 = arith.constant 1 : index
      %21 = memref.load %arg3[%c1] : memref<2xf32, #tpu.memory_space<smem>>
      %22 = vector.broadcast %20 : f32 to vector<16x128xf32>
      %23 = arith.mulf %22, %18 : vector<16x128xf32>
      %24 = arith.mulf %18, %18 : vector<16x128xf32>
      %25 = arith.subf %24, %19 : vector<16x128xf32>
      %26 = vector.broadcast %21 : f32 to vector<16x128xf32>
      %27 = arith.mulf %26, %25 : vector<16x128xf32>
      %28 = arith.addf %23, %27 : vector<16x128xf32>
      %c0_24 = arith.constant 0 : index
      %c0_25 = arith.constant 0 : index
      %29 = vector.load %arg8[%c0_24, %c0_25] : memref<16x128xf32, #tpu.memory_space<vmem>>, vector<16x128xf32>
      tpu.vector_store %arg8[%c0_24, %c0_25], %28 {strides = array<i32>} : memref<16x128xf32, #tpu.memory_space<vmem>>, vector<16x128xf32>,
    } else {
    }
    return
  }
  func.func @transform_0(%arg0: i32, %arg1: i32, %arg2: i32) -> i32 {
    %c0_i32 = arith.constant 0 : i32
    %c0_i32_0 = arith.constant 0 : i32
    return %c0_i32 : i32
  }
  func.func @transform_1(%arg0: i32, %arg1: i32, %arg2: i32) -> (i32, i32) {
    %c0_i32 = arith.constant 0 : i32
    return %arg0, %arg2 : i32, i32
  }
  func.func @transform_2(%arg0: i32, %arg1: i32, %arg2: i32) -> (i32, i32) {
    %c0_i32 = arith.constant 0 : i32
    return %arg0, %arg2 : i32, i32
  }
  func.func @transform_3(%arg0: i32, %arg1: i32, %arg2: i32) -> (i32, i32) {
    %c0_i32 = arith.constant 0 : i32
    return %arg2, %arg1 : i32, i32
  }
  func.func @transform_4(%arg0: i32, %arg1: i32, %arg2: i32) -> (i32, i32) {
    %c0_i32 = arith.constant 0 : i32
    return %arg2, %arg1 : i32, i32
  }
  func.func @transform_5(%arg0: i32, %arg1: i32, %arg2: i32) -> (i32, i32) {
    %c0_i32 = arith.constant 0 : i32
    return %arg0, %arg1 : i32, i32
  }
}

</mosaic_0001>

<llo_original>
// kernel: tpu_custom_call.1
$region0: #{tpu_custom_call.1}
  #allocation0 [shape = 'u32[]', space=smem, size = 0x4, offset = 0x4, fixed_abs, tag = 'smem constant byte address 0x4 - core index']
  #allocation1 [shape = 'u32[72,128]{1,0:T(1,128)}', space=vmem, size = 0x9000, scoped, tag = 'internal scratch']
  #allocation2 [shape = 'f32[16,128]{1,0:T(8,128)}', space=vmem, size = 0x2000, scoped, tag = 'scratch operand']
  #allocation3 [shape = 'f32[16,128]{1,0:T(8,128)}', space=vmem, size = 0x2000, scoped, tag = 'scratch operand']
  %s0 = inlined_call_operand.hbm [shape: f32[2], index: 0, kind: input, shape index: {}]
  %s1 = inlined_call_operand.hbm [shape: bf16[16,128], index: 1, kind: input, shape index: {}]
  %s2 = inlined_call_operand.hbm [shape: bf16[16,128], index: 2, kind: input, shape index: {}]
  %s3 = inlined_call_operand.hbm [shape: bf16[128,128], index: 3, kind: input, shape index: {}]
  %s4 = inlined_call_operand.hbm [shape: bf16[128,128], index: 4, kind: input, shape index: {}]
  %s5 = inlined_call_operand.hbm [shape: f32[16,128], index: 5, kind: output, shape index: {}]
  %s6 = sld [smem:[#allocation0]]
  $region58: #{tpu_custom_call.1} parent=0
    _
  %s8 = ssub.s32 1, %s6
  %s9 = scalar_select 0, %s8, %s6
  $region1: #{tpu_custom_call.1} parent=0
    #allocation4 [shape = 'u8[512]{0}', space=smem, size = 0x200, scoped, tag = 'input window, operand 0, single buffered']
    #allocation5 [shape = 's32[1]{0}', space=sflag, size = 0x4, scoped, tag = 'scoped memory for tpu_custom_call.1']
    #allocation6 [shape = 's32[1]{0}', space=sflag, size = 0x4, scoped, tag = 'scoped memory for tpu_custom_call.1']
    #allocation7 [shape = 's32[1]{0}', space=sflag, size = 0x4, scoped, tag = 'scoped memory for tpu_custom_call.1']
    #allocation8 [shape = 'u8[4096]{0}', space=vmem, size = 0x1000, scoped, tag = 'input window, operand 1, single buffered']
    #allocation9 [shape = 'u8[4096]{0}', space=vmem, size = 0x1000, scoped, tag = 'input window, operand 2, single buffered']
    #allocation10 [shape = 's32[1]{0}', space=sflag, size = 0x4, scoped, tag = 'scoped memory for tpu_custom_call.1']
    #allocation11 [shape = 'u8[32768]{0}', space=vmem, size = 0x8000, scoped, tag = 'input window, operand 3, single buffered']
    #allocation12 [shape = 'u8[32768]{0}', space=vmem, size = 0x8000, scoped, tag = 'input window, operand 4, single buffered']
    #allocation13 [shape = 's32[1]{0}', space=sflag, size = 0x4, scoped, tag = 'scoped memory for tpu_custom_call.1']
    #allocation14 [shape = 'u8[8192]{0}', space=vmem, size = 0x2000, scoped, tag = 'output window, operand 0, single buffered']
    %10 = vsyncpa [#allocation7], 0
    %11 = vsyncpa [#allocation5], 0
    %12 = vsyncpa [#allocation10], 0
    %13 = vsyncpa [#allocation13], 0
    %14 = vsyncpa [#allocation6], 0
    // Predicated region
    $region2: #{tpu_custom_call.1} parent=1 // pred_check
      _
    $region3: #{tpu_custom_call.1} parent=1 // pred_check_branch
      %16 = sbr.rel (0) target = $region5
    $region4: #{tpu_custom_call.1} parent=1 // pred_region
      %18 = vsyncadd [#allocation7], 0
      %s20 = sshll.u32 %s0, 4
      %s21 = int_to_ptr.hbm [resolvable:$true] %s20
      %23 = dma.hbm_to_smem %s21, 16, [#allocation4], [#allocation7]
    $region5: #{tpu_custom_call.1} parent=1 // pred_fallthru
      _
    // Predicated region
    $region6: #{tpu_custom_call.1} parent=1 // pred_check
      _
    $region7: #{tpu_custom_call.1} parent=1 // pred_check_branch
      %25 = sbr.rel (0) target = $region9
    $region8: #{tpu_custom_call.1} parent=1 // pred_region
      %27 = vsyncadd [#allocation5], 0
      %s28 = sshll.u32 %s1, 4
      %s29 = int_to_ptr.hbm [resolvable:$true] %s28
      %s30 = sshll.u32 [#allocation8], 4
      %s31 = int_to_ptr.vmem [resolvable:$true] %s30
      %36 = dma.hbm_to_vmem [thread:$0]  %s29, 128, %s31, [#allocation5], 64, 64, 4
    $region9: #{tpu_custom_call.1} parent=1 // pred_fallthru
      _
    // Predicated region
    $region10: #{tpu_custom_call.1} parent=1 // pred_check
      _
    $region11: #{tpu_custom_call.1} parent=1 // pred_check_branch
      %38 = sbr.rel (0) target = $region13
    $region12: #{tpu_custom_call.1} parent=1 // pred_region
      %40 = vsyncadd [#allocation10], 0
      %s41 = sshll.u32 %s2, 4
      %s42 = int_to_ptr.hbm [resolvable:$true] %s41
      %s43 = sshll.u32 [#allocation9], 4
      %s44 = int_to_ptr.vmem [resolvable:$true] %s43
      %49 = dma.hbm_to_vmem [thread:$0]  %s42, 128, %s44, [#allocation10], 64, 64, 4
    $region13: #{tpu_custom_call.1} parent=1 // pred_fallthru
      _
    // Predicated region
    $region14: #{tpu_custom_call.1} parent=1 // pred_check
      _
    $region15: #{tpu_custom_call.1} parent=1 // pred_check_branch
      %51 = sbr.rel (0) target = $region17
    $region16: #{tpu_custom_call.1} parent=1 // pred_region
      %53 = vsyncadd [#allocation10], 0
      %s54 = sshll.u32 %s3, 4
      %s55 = int_to_ptr.hbm [resolvable:$true] %s54
      %s56 = sshll.u32 [#allocation11], 4
      %s57 = int_to_ptr.vmem [resolvable:$true] %s56
      %62 = dma.hbm_to_vmem [thread:$0]  %s55, 1024, %s57, [#allocation10], 64, 64, 4
    $region17: #{tpu_custom_call.1} parent=1 // pred_fallthru
      _
    // Predicated region
    $region18: #{tpu_custom_call.1} parent=1 // pred_check
      _
    $region19: #{tpu_custom_call.1} parent=1 // pred_check_branch
      %64 = sbr.rel (0) target = $region21
    $region20: #{tpu_custom_call.1} parent=1 // pred_region
      %66 = vsyncadd [#allocation13], 0
      %s67 = sshll.u32 %s4, 4
      %s68 = int_to_ptr.hbm [resolvable:$true] %s67
      %s69 = sshll.u32 [#allocation12], 4
      %s70 = int_to_ptr.vmem [resolvable:$true] %s69
      %75 = dma.hbm_to_vmem [thread:$0]  %s68, 1024, %s70, [#allocation13], 64, 64, 4
    $region21: #{tpu_custom_call.1} parent=1 // pred_fallthru
      _
    // Predicated region
    $region22: #{tpu_custom_call.1} parent=1 // pred_check
      _
    $region23: #{tpu_custom_call.1} parent=1 // pred_check_branch
      %77 = sbr.rel (0) target = $region25
    $region24: #{tpu_custom_call.1} parent=1 // pred_region
      %79 = dma.done [#allocation7], 16
    $region25: #{tpu_custom_call.1} parent=1 // pred_fallthru
      _
    // Predicated region
    $region26: #{tpu_custom_call.1} parent=1 // pred_check
      _
    $region27: #{tpu_custom_call.1} parent=1 // pred_check_branch
      %81 = sbr.rel (0) target = $region29
    $region28: #{tpu_custom_call.1} parent=1 // pred_region
      %83 = dma.done [#allocation5], 128
    $region29: #{tpu_custom_call.1} parent=1 // pred_fallthru
      _
    // Predicated region
    $region30: #{tpu_custom_call.1} parent=1 // pred_check
      _
    $region31: #{tpu_custom_call.1} parent=1 // pred_check_branch
      %85 = sbr.rel (0) target = $region33
    $region32: #{tpu_custom_call.1} parent=1 // pred_region
      %87 = dma.done [#allocation10], 128
    $region33: #{tpu_custom_call.1} parent=1 // pred_fallthru
      _
    // Predicated region
    $region34: #{tpu_custom_call.1} parent=1 // pred_check
      _
    $region35: #{tpu_custom_call.1} parent=1 // pred_check_branch
      %89 = sbr.rel (0) target = $region37
    $region36: #{tpu_custom_call.1} parent=1 // pred_region
      %91 = dma.done [#allocation10], 1024
    $region37: #{tpu_custom_call.1} parent=1 // pred_fallthru
      _
    // Predicated region
    $region38: #{tpu_custom_call.1} parent=1 // pred_check
      _
    $region39: #{tpu_custom_call.1} parent=1 // pred_check_branch
      %93 = sbr.rel (0) target = $region41
    $region40: #{tpu_custom_call.1} parent=1 // pred_region
      %95 = dma.done [#allocation13], 1024
    $region41: #{tpu_custom_call.1} parent=1 // pred_fallthru
      _
    %96 = sfence
    %p97 = scmp.eq.s32.totalorder 0, 0
    // Predicated region
    $region42: #{tpu_custom_call.1} parent=1 // pred_check
      %p98 = pneg %p97
    $region43: #{tpu_custom_call.1} parent=1 // pred_check_branch
      %100 = sbr.rel (%p98) target = $region45
    $region44: #{tpu_custom_call.1} parent=1 // pred_region
      %101 = vst [vmem:[#allocation2] sm:$0xff] 0.0
      %102 = vst [vmem:[#allocation2 + $0x8] sm:$0xff] 0.0
      %103 = vst [vmem:[#allocation3] sm:$0xff] 0.0
      %104 = vst [vmem:[#allocation3 + $0x8] sm:$0xff] 0.0
    $region45: #{tpu_custom_call.1} parent=1 // pred_fallthru
      _
    %v105 = vld [vmem:[#allocation2] sm:$0xff]
    %v106 = vld [vmem:[#allocation2 + $0x8] sm:$0xff]
    %v107 = vld [vmem:[#allocation8] sm:$0xf]
    %v108 = vld [vmem:[#allocation8 + $0x4] sm:$0xf]
    %v109 = vld [vmem:[#allocation11] sm:$0xf]
    %v110 = vld [vmem:[#allocation11 + $0x4] sm:$0xf]
    %v111 = vld [vmem:[#allocation11 + $0x8] sm:$0xf]
    %v112 = vld [vmem:[#allocation11 + $0xc] sm:$0xf]
    %v113 = vld [vmem:[#allocation11 + $0x10] sm:$0xf]
    %v114 = vld [vmem:[#allocation11 + $0x14] sm:$0xf]
    %v115 = vld [vmem:[#allocation11 + $0x18] sm:$0xf]
    %v116 = vld [vmem:[#allocation11 + $0x1c] sm:$0xf]
    %v117 = vld [vmem:[#allocation11 + $0x20] sm:$0xf]
    %v118 = vld [vmem:[#allocation11 + $0x24] sm:$0xf]
    %v119 = vld [vmem:[#allocation11 + $0x28] sm:$0xf]
    %v120 = vld [vmem:[#allocation11 + $0x2c] sm:$0xf]
    %v121 = vld [vmem:[#allocation11 + $0x30] sm:$0xf]
    %v122 = vld [vmem:[#allocation11 + $0x34] sm:$0xf]
    %v123 = vld [vmem:[#allocation11 + $0x38] sm:$0xf]
    %v124 = vld [vmem:[#allocation11 + $0x3c] sm:$0xf]
    %v127 = vunpack.c.l.b16 %v107
    %v128 = vunpack.c.l.b16 %v108
    %v129 = vpack.c.b16 %v128, %v127
    %v147 = vunpack.c.l.b16 %v109
    %v148 = vunpack.c.l.b16 %v110
    %v149 = vunpack.c.l.b16 %v111
    %v150 = vunpack.c.l.b16 %v112
    %v151 = vunpack.c.l.b16 %v113
    %v152 = vunpack.c.l.b16 %v114
    %v153 = vunpack.c.l.b16 %v115
    %v154 = vunpack.c.l.b16 %v116
    %v155 = vunpack.c.l.b16 %v117
    %v156 = vunpack.c.l.b16 %v118
    %v157 = vunpack.c.l.b16 %v119
    %v158 = vunpack.c.l.b16 %v120
    %v159 = vunpack.c.l.b16 %v121
    %v160 = vunpack.c.l.b16 %v122
    %v161 = vunpack.c.l.b16 %v123
    %v162 = vunpack.c.l.b16 %v124
    %v163 = vpack.c.b16 %v148, %v147
    %v164 = vpack.c.b16 %v150, %v149
    %v165 = vpack.c.b16 %v152, %v151
    %v166 = vpack.c.b16 %v154, %v153
    %v167 = vpack.c.b16 %v156, %v155
    %v168 = vpack.c.b16 %v158, %v157
    %v169 = vpack.c.b16 %v160, %v159
    %v170 = vpack.c.b16 %v162, %v161
    %179 = vmatpush.bf16.msra.mxu0 %v170
    %180 = vmatpush.bf16.msra.mxu0 %v169
    %181 = vmatpush.bf16.msra.mxu0 %v168
    %182 = vmatpush.bf16.msra.mxu0 %v167
    %183 = vmatpush.bf16.msra.mxu0 %v166
    %184 = vmatpush.bf16.msra.mxu0 %v165
    %185 = vmatpush.bf16.msra.mxu0 %v164
    %186 = vmatpush.bf16.msra.mxu0 %v163
    %187 = vmatmul.bf16.gmra.mxu0 %v129
    %v188 = vpop.f32.mrf.mxu0
    %v189 = vadd.f32 0.0, %v188
    %v190 = vpop.f32.mrf.mxu0
    %v191 = vadd.f32 0.0, %v190
    %192 = vdwg.mxu0
    %v193 = vadd.f32 %v105, %v189
    %v194 = vadd.f32 %v106, %v191
    %195 = vst [vmem:[#allocation2] sm:$0xff] %v193
    %196 = vst [vmem:[#allocation2 + $0x8] sm:$0xff] %v194
    %v197 = vld [vmem:[#allocation3] sm:$0xff]
    %v198 = vld [vmem:[#allocation3 + $0x8] sm:$0xff]
    %v199 = vld [vmem:[#allocation9] sm:$0xf]
    %v200 = vld [vmem:[#allocation9 + $0x4] sm:$0xf]
    %v201 = vld [vmem:[#allocation12] sm:$0xf]
    %v202 = vld [vmem:[#allocation12 + $0x4] sm:$0xf]
    %v203 = vld [vmem:[#allocation12 + $0x8] sm:$0xf]
    %v204 = vld [vmem:[#allocation12 + $0xc] sm:$0xf]
    %v205 = vld [vmem:[#allocation12 + $0x10] sm:$0xf]
    %v206 = vld [vmem:[#allocation12 + $0x14] sm:$0xf]
    %v207 = vld [vmem:[#allocation12 + $0x18] sm:$0xf]
    %v208 = vld [vmem:[#allocation12 + $0x1c] sm:$0xf]
    %v209 = vld [vmem:[#allocation12 + $0x20] sm:$0xf]
    %v210 = vld [vmem:[#allocation12 + $0x24] sm:$0xf]
    %v211 = vld [vmem:[#allocation12 + $0x28] sm:$0xf]
    %v212 = vld [vmem:[#allocation12 + $0x2c] sm:$0xf]
    %v213 = vld [vmem:[#allocation12 + $0x30] sm:$0xf]
    %v214 = vld [vmem:[#allocation12 + $0x34] sm:$0xf]
    %v215 = vld [vmem:[#allocation12 + $0x38] sm:$0xf]
    %v216 = vld [vmem:[#allocation12 + $0x3c] sm:$0xf]
    %v219 = vunpack.c.l.b16 %v199
    %v220 = vunpack.c.l.b16 %v200
    %v221 = vpack.c.b16 %v220, %v219
    %v239 = vunpack.c.l.b16 %v201
    %v240 = vunpack.c.l.b16 %v202
    %v241 = vunpack.c.l.b16 %v203
    %v242 = vunpack.c.l.b16 %v204
    %v243 = vunpack.c.l.b16 %v205
    %v244 = vunpack.c.l.b16 %v206
    %v245 = vunpack.c.l.b16 %v207
    %v246 = vunpack.c.l.b16 %v208
    %v247 = vunpack.c.l.b16 %v209
    %v248 = vunpack.c.l.b16 %v210
    %v249 = vunpack.c.l.b16 %v211
    %v250 = vunpack.c.l.b16 %v212
    %v251 = vunpack.c.l.b16 %v213
    %v252 = vunpack.c.l.b16 %v214
    %v253 = vunpack.c.l.b16 %v215
    %v254 = vunpack.c.l.b16 %v216
    %v255 = vpack.c.b16 %v240, %v239
    %v256 = vpack.c.b16 %v242, %v241
    %v257 = vpack.c.b16 %v244, %v243
    %v258 = vpack.c.b16 %v246, %v245
    %v259 = vpack.c.b16 %v248, %v247
    %v260 = vpack.c.b16 %v250, %v249
    %v261 = vpack.c.b16 %v252, %v251
    %v262 = vpack.c.b16 %v254, %v253
    %271 = vmatpush.bf16.msra.mxu0 %v262
    %272 = vmatpush.bf16.msra.mxu0 %v261
    %273 = vmatpush.bf16.msra.mxu0 %v260
    %274 = vmatpush.bf16.msra.mxu0 %v259
    %275 = vmatpush.bf16.msra.mxu0 %v258
    %276 = vmatpush.bf16.msra.mxu0 %v257
    %277 = vmatpush.bf16.msra.mxu0 %v256
    %278 = vmatpush.bf16.msra.mxu0 %v255
    %279 = vmatmul.bf16.gmra.mxu0 %v221
    %v280 = vpop.f32.mrf.mxu0
    %v281 = vadd.f32 0.0, %v280
    %v282 = vpop.f32.mrf.mxu0
    %v283 = vadd.f32 0.0, %v282
    %284 = vdwg.mxu0
    %v285 = vadd.f32 %v197, %v281
    %v286 = vadd.f32 %v198, %v283
    %287 = vst [vmem:[#allocation3] sm:$0xff] %v285
    %288 = vst [vmem:[#allocation3 + $0x8] sm:$0xff] %v286
    // Predicated region
    $region46: #{tpu_custom_call.1} parent=1 // pred_check
      %p289 = pneg %p97
    $region47: #{tpu_custom_call.1} parent=1 // pred_check_branch
      %291 = sbr.rel (%p289) target = $region49
    $region48: #{tpu_custom_call.1} parent=1 // pred_region
      %v292 = vld [vmem:[#allocation2] sm:$0xff]
      %v293 = vld [vmem:[#allocation2 + $0x8] sm:$0xff]
      %v294 = vld [vmem:[#allocation3] sm:$0xff]
      %v295 = vld [vmem:[#allocation3 + $0x8] sm:$0xff]
      %s296 = sld [smem:[#allocation4]]
      %s297 = sld [smem:[#allocation4 + $0x1]]
      %v298 = vstv %s296
      %v299 = vmul.f32 %v298, %v292
      %v300 = vmul.f32 %v298, %v293
      %v301 = vmul.f32 %v292, %v292
      %v302 = vmul.f32 %v293, %v293
      %v303 = vsub.f32 %v301, %v294
      %v304 = vsub.f32 %v302, %v295
      %v305 = vstv %s297
      %v306 = vmul.f32 %v305, %v303
      %v307 = vmul.f32 %v305, %v304
      %v308 = vadd.f32 %v299, %v306
      %v309 = vadd.f32 %v300, %v307
      %310 = vst [vmem:[#allocation14] sm:$0xff] %v308
      %311 = vst [vmem:[#allocation14 + $0x8] sm:$0xff] %v309
    $region49: #{tpu_custom_call.1} parent=1 // pred_fallthru
      _
    // Predicated region
    $region50: #{tpu_custom_call.1} parent=1 // pred_check
      _
    $region51: #{tpu_custom_call.1} parent=1 // pred_check_branch
      %313 = sbr.rel (0) target = $region53
    $region52: #{tpu_custom_call.1} parent=1 // pred_region
      %315 = vsyncadd [#allocation6], 0
      %s316 = sshll.u32 [#allocation14], 4
      %s317 = int_to_ptr.vmem [resolvable:$true] %s316
      %s318 = sshll.u32 %s5, 4
      %s319 = int_to_ptr.hbm [resolvable:$true] %s318
      %324 = dma.vmem_to_hbm [thread:$0]  %s317, 256, %s319, [#allocation6], 128, 128, 8
    $region53: #{tpu_custom_call.1} parent=1 // pred_fallthru
      _
    // Predicated region
    $region54: #{tpu_custom_call.1} parent=1 // pred_check
      _
    $region55: #{tpu_custom_call.1} parent=1 // pred_check_branch
      %326 = sbr.rel (0) target = $region57
    $region56: #{tpu_custom_call.1} parent=1 // pred_region
      %328 = dma.done [#allocation6], 256
    $region57: #{tpu_custom_call.1} parent=1 // pred_fallthru
      _
    %329 = vsyncpa [#allocation5], 1
    %330 = vsyncpa [#allocation10], 1
    %331 = vsyncpa [#allocation13], 1
    %332 = vsyncpa [#allocation6], 1
    %333 = vsyncpa [#allocation7], 1

</llo_original>
